<compile_context>
chip_gen: v5e
topology: v5e:2x2
jax: 0.10.0
libtpu: 0.0.40
codegen_flags: <defaults>
</compile_context>

<pallas_src>
import jax
import jax.numpy as jnp
from jax.experimental import pallas as pl
from jax.experimental.pallas import tpu as pltpu


def _round_up(x, m):
    return ((x + m - 1) // m) * m


# ----------------------------------------------------------------------------
# Kernel 1: one LightGCN propagation layer  Y = G @ X,  acc_out = acc_in + Y
# ----------------------------------------------------------------------------
def _gcn_layer_kernel(g_ref, x_ref, accin_ref, y_ref, accout_ref, acc_scr):
    k = pl.program_id(1)

    @pl.when(k == 0)
    def _():
        acc_scr[...] = jnp.zeros_like(acc_scr)

    acc_scr[...] += jnp.dot(g_ref[...], x_ref[...],
                            preferred_element_type=jnp.float32)

    @pl.when(k == pl.num_programs(1) - 1)
    def _():
        y = acc_scr[...]
        y_ref[...] = y.astype(y_ref.dtype)
        accout_ref[...] = accin_ref[...] + y.astype(accout_ref.dtype)


def _make_prop_call(Np, D, tm, tk):
    grid = (Np // tm, Np // tk)
    return pl.pallas_call(
        _gcn_layer_kernel,
        out_shape=(jax.ShapeDtypeStruct((Np, D), jnp.float32),
                   jax.ShapeDtypeStruct((Np, D), jnp.float32)),
        grid_spec=pltpu.PrefetchScalarGridSpec(
            num_scalar_prefetch=0,
            grid=grid,
            in_specs=[
                pl.BlockSpec((tm, tk), lambda i, k: (i, k)),   # graph tile
                pl.BlockSpec((tk, D), lambda i, k: (k, 0)),    # current embeddings
                pl.BlockSpec((tm, D), lambda i, k: (i, 0)),    # running layer-sum
            ],
            out_specs=[
                pl.BlockSpec((tm, D), lambda i, k: (i, 0)),    # new embeddings
                pl.BlockSpec((tm, D), lambda i, k: (i, 0)),    # new running layer-sum
            ],
            scratch_shapes=[pltpu.VMEM((tm, D), jnp.float32)],
        ),
        compiler_params=pltpu.CompilerParams(
            dimension_semantics=("parallel", "arbitrary")),
    )


def _prop_tiles(N):
    """Pick (Np, tm, tk) so that tiles evenly divide the (padded) node count."""
    if N <= 256:
        Np = _round_up(N, 8)       # sublane-align; full-dim blocks on the lane axis
        return Np, Np, Np
    Np = _round_up(N, 256)
    return Np, 256, 256


# ----------------------------------------------------------------------------
# Kernel 2: lane-dense per-pair dot product  gamma[b] = sum_d u[d,b] * i[d,b]
# ----------------------------------------------------------------------------
def _score_kernel(u_ref, i_ref, o_ref):
    # u_ref, i_ref: (D, TB) VMEM tiles, batch on the 128-lane axis.
    # o_ref: (1, TB) lane-dense output block (unmasked vst).
    o_ref[...] = jnp.sum(u_ref[...] * i_ref[...], axis=0, keepdims=True)


# ----------------------------------------------------------------------------
# Full forward
# ----------------------------------------------------------------------------
def lightkggcn_forward(user_w, item_w, other_w, graph, users, items,
                       *, n_layers, tile_b=1024):
    """LightKGGCN.forward (inference): returns gamma of shape (B,).

    user_w/item_w/other_w : (nu, D)/(ni, D)/(no, D) float32 embedding tables
    graph                 : (N, N) float32 normalized adjacency (densified)
    users, items          : (B,) integer indices
    """
    nu, D = user_w.shape
    ni = item_w.shape[0]
    no = other_w.shape[0]
    N = nu + ni + no

    all_e = jnp.concatenate([user_w, item_w, other_w], axis=0).astype(jnp.float32)
    graph = graph.astype(jnp.float32)

    # --- LightGCN propagation: mean over layer outputs --------------------
    # TODO(synk): torch uses a torch.sparse adjacency (optionally A_split); here
    # the graph is densified for the MXU and training-time dropout is skipped.
    Np, tm, tk = _prop_tiles(N)
    if Np != N:
        graph_p = jnp.pad(graph, ((0, Np - N), (0, Np - N)))
        emb = jnp.pad(all_e, ((0, Np - N), (0, 0)))
    else:
        graph_p, emb = graph, all_e

    prop = _make_prop_call(Np, D, tm, tk)
    acc = emb                              # layer-0 term of the running sum
    for _ in range(n_layers):
        emb, acc = prop(graph_p, emb, acc)
    lgn_out = (acc / jnp.float32(n_layers + 1))[:N]

    all_users = lgn_out[:nu]               # (nu, D)
    all_items = lgn_out[nu:nu + ni]        # (ni, D)

    # --- per-pair scoring --------------------------------------------------
    users = users.astype(jnp.int32)
    items = items.astype(jnp.int32)
    B = users.shape[0]

    Bp0 = _round_up(B, 128)
    tb = min(tile_b, Bp0)
    # keep >= 2 grid steps when the batch allows (v7x has 2 TensorCores)
    if Bp0 >= 2 * 128 and Bp0 // tb < 2:
        tb = max(128, ((Bp0 // 2) // 128) * 128)
    Bp = _round_up(B, tb)

    # Pad only the tiny index arrays; the gather then produces padded slabs
    # directly (no extra full-copy jnp.pad of (B, D) data).
    if Bp != B:
        users = jnp.pad(users, (0, Bp - B))
        items = jnp.pad(items, (0, Bp - B))

    # Gather + transpose in the wrapper (glue); batch lands on the lane axis.
    u_t = jnp.take(all_users, users, axis=0).T        # (D, Bp)
    i_t = jnp.take(all_items, items, axis=0).T        # (D, Bp)

    gamma = pl.pallas_call(
        _score_kernel,
        out_shape=jax.ShapeDtypeStruct((1, Bp), jnp.float32),
        grid_spec=pltpu.PrefetchScalarGridSpec(
            num_scalar_prefetch=0,
            grid=(Bp // tb,),
            in_specs=[
                pl.BlockSpec((D, tb), lambda b: (0, b)),
                pl.BlockSpec((D, tb), lambda b: (0, b)),
            ],
            out_specs=pl.BlockSpec((1, tb), lambda b: (0, b)),
        ),
        compiler_params=pltpu.CompilerParams(
            dimension_semantics=("parallel",)),
    )(u_t, i_t)

    return gamma[0, :B]


if __name__ == "__main__":
    # Small, deterministic example consistent with the module.
    num_users, num_items, num_others = 48, 64, 16      # N = 128
    latent_dim = 32                                     # config['latent_dim_rec']
    n_layers = 2                                        # config['lgn_layers']
    batch = 8

    key = jax.random.PRNGKey(0)
    ku, ki, ko, kg, kui, kii = jax.random.split(key, 6)

    # nn.init.normal_(..., std=0.1)
    user_w = 0.1 * jax.random.normal(ku, (num_users, latent_dim), dtype=jnp.float32)
    item_w = 0.1 * jax.random.normal(ki, (num_items, latent_dim), dtype=jnp.float32)
    other_w = 0.1 * jax.random.normal(ko, (num_others, latent_dim), dtype=jnp.float32)

    # Dense stand-in for dataset.getSparseGraph(): symmetric normalized adjacency.
    N = num_users + num_items + num_others
    a = (jax.random.uniform(kg, (N, N)) < 0.05).astype(jnp.float32)
    a = jnp.maximum(a, a.T)
    deg = jnp.clip(jnp.sum(a, axis=1), 1.0, None)
    d_inv_sqrt = 1.0 / jnp.sqrt(deg)
    graph = a * d_inv_sqrt[:, None] * d_inv_sqrt[None, :]

    users = jax.random.randint(kui, (batch,), 0, num_users, dtype=jnp.int32)
    items = jax.random.randint(kii, (batch,), 0, num_items, dtype=jnp.int32)

    gamma = lightkggcn_forward(user_w, item_w, other_w, graph, users, items,
                               n_layers=n_layers)
    gamma = jax.block_until_ready(gamma)

    # Pure-JAX reference (same math as the torch module's forward).
    all_e = jnp.concatenate([user_w, item_w, other_w], axis=0)
    embs = [all_e]
    cur = all_e
    for _ in range(n_layers):
        cur = graph @ cur
        embs.append(cur)
    lgn = jnp.mean(jnp.stack(embs, axis=1), axis=1)
    au = lgn[:num_users]
    ai = lgn[num_users:num_users + num_items]
    ref = jnp.sum(au[users] * ai[items], axis=1)

    assert gamma.shape == (batch,)
    assert jnp.allclose(gamma, ref, atol=1e-5, rtol=1e-4)

    print("KERNEL_OK")
</pallas_src>

<mosaic_0001>
module attributes {stable_mosaic.version = 11 : i64} {
  func.func @_gcn_layer_kernel(%arg0: i32, %arg1: i32, %arg2: memref<128x128xf32, #tpu.memory_space<vmem>>, %arg3: memref<128x32xf32, #tpu.memory_space<vmem>>, %arg4: memref<128x32xf32, #tpu.memory_space<vmem>>, %arg5: memref<128x32xf32, #tpu.memory_space<vmem>>, %arg6: memref<128x32xf32, #tpu.memory_space<vmem>>, %arg7: memref<128x32xf32, #tpu.memory_space<vmem>>) attributes {dimension_semantics = [#tpu.dimension_semantics<parallel>, #tpu.dimension_semantics<arbitrary>], iteration_bounds = array<i64: 1, 1>, scalar_prefetch = 0 : i64, scratch_operands = 1 : i64, tpu.core_type = #tpu.core_type<tc>, window_params = [{transform_indices = @transform_0, window_bounds = array<i64: 128, 128>}, {transform_indices = @transform_1, window_bounds = array<i64: 128, 32>}, {transform_indices = @transform_2, window_bounds = array<i64: 128, 32>}, {transform_indices = @transform_3, window_bounds = array<i64: 128, 32>}, {transform_indices = @transform_4, window_bounds = array<i64: 128, 32>}]} {
    %c0_i32 = arith.constant 0 : i32
    %0 = arith.cmpi eq, %arg1, %c0_i32 : i32
    %1 = arith.extui %0 : i1 to i32
    %c0_i32_0 = arith.constant 0 : i32
    %2 = arith.cmpi ne, %1, %c0_i32_0 : i32
    scf.if %2 {
      %cst_10 = arith.constant 0.000000e+00 : f32
      %12 = vector.broadcast %cst_10 : f32 to vector<128x32xf32>
      %c0_11 = arith.constant 0 : index
      %c0_12 = arith.constant 0 : index
      %13 = vector.load %arg7[%c0_11, %c0_12] : memref<128x32xf32, #tpu.memory_space<vmem>>, vector<128x32xf32>
      tpu.vector_store %arg7[%c0_11, %c0_12], %12 {strides = array<i32>} : memref<128x32xf32, #tpu.memory_space<vmem>>, vector<128x32xf32>,
    } else {
    }
    %c0 = arith.constant 0 : index
    %c0_1 = arith.constant 0 : index
    %3 = vector.load %arg7[%c0, %c0_1] : memref<128x32xf32, #tpu.memory_space<vmem>>, vector<128x32xf32>
    %c0_2 = arith.constant 0 : index
    %c0_3 = arith.constant 0 : index
    %4 = vector.load %arg2[%c0_2, %c0_3] : memref<128x128xf32, #tpu.memory_space<vmem>>, vector<128x128xf32>
    %c0_4 = arith.constant 0 : index
    %c0_5 = arith.constant 0 : index
    %5 = vector.load %arg3[%c0_4, %c0_5] : memref<128x32xf32, #tpu.memory_space<vmem>>, vector<128x32xf32>
    %cst = arith.constant dense<0.000000e+00> : vector<128x32xf32>
    %6 = tpu.matmul %4, %5, %cst {dimension_numbers = #tpu.dot_dimension_numbers<[1], [0], [0], [1], [0, 0, 1, 1], [], []>} : vector<128x128xf32>, vector<128x32xf32>, vector<128x32xf32> -> vector<128x32xf32>
    %7 = arith.addf %3, %6 : vector<128x32xf32>
    %c0_6 = arith.constant 0 : index
    %c0_7 = arith.constant 0 : index
    %8 = vector.load %arg7[%c0_6, %c0_7] : memref<128x32xf32, #tpu.memory_space<vmem>>, vector<128x32xf32>
    tpu.vector_store %arg7[%c0_6, %c0_7], %7 {strides = array<i32>} : memref<128x32xf32, #tpu.memory_space<vmem>>, vector<128x32xf32>,
    %c0_i32_8 = arith.constant 0 : i32
    %9 = arith.cmpi eq, %arg1, %c0_i32_8 : i32
    %10 = arith.extui %9 : i1 to i32
    %c0_i32_9 = arith.constant 0 : i32
    %11 = arith.cmpi ne, %10, %c0_i32_9 : i32
    scf.if %11 {
      %c0_10 = arith.constant 0 : index
      %c0_11 = arith.constant 0 : index
      %12 = vector.load %arg7[%c0_10, %c0_11] : memref<128x32xf32, #tpu.memory_space<vmem>>, vector<128x32xf32>
      %c0_12 = arith.constant 0 : index
      %c0_13 = arith.constant 0 : index
      %13 = vector.load %arg5[%c0_12, %c0_13] : memref<128x32xf32, #tpu.memory_space<vmem>>, vector<128x32xf32>
      tpu.vector_store %arg5[%c0_12, %c0_13], %12 {strides = array<i32>} : memref<128x32xf32, #tpu.memory_space<vmem>>, vector<128x32xf32>,
      %c0_14 = arith.constant 0 : index
      %c0_15 = arith.constant 0 : index
      %14 = vector.load %arg4[%c0_14, %c0_15] : memref<128x32xf32, #tpu.memory_space<vmem>>, vector<128x32xf32>
      %15 = arith.addf %14, %12 : vector<128x32xf32>
      %c0_16 = arith.constant 0 : index
      %c0_17 = arith.constant 0 : index
      %16 = vector.load %arg6[%c0_16, %c0_17] : memref<128x32xf32, #tpu.memory_space<vmem>>, vector<128x32xf32>
      tpu.vector_store %arg6[%c0_16, %c0_17], %15 {strides = array<i32>} : memref<128x32xf32, #tpu.memory_space<vmem>>, vector<128x32xf32>,
    } else {
    }
    return
  }
  func.func @transform_0(%arg0: i32, %arg1: i32) -> (i32, i32) {
    %c0_i32 = arith.constant 0 : i32
    return %arg0, %arg1 : i32, i32
  }
  func.func @transform_1(%arg0: i32, %arg1: i32) -> (i32, i32) {
    %c0_i32 = arith.constant 0 : i32
    %c0_i32_0 = arith.constant 0 : i32
    return %arg1, %c0_i32 : i32, i32
  }
  func.func @transform_2(%arg0: i32, %arg1: i32) -> (i32, i32) {
    %c0_i32 = arith.constant 0 : i32
    %c0_i32_0 = arith.constant 0 : i32
    return %arg0, %c0_i32 : i32, i32
  }
  func.func @transform_3(%arg0: i32, %arg1: i32) -> (i32, i32) {
    %c0_i32 = arith.constant 0 : i32
    %c0_i32_0 = arith.constant 0 : i32
    return %arg0, %c0_i32 : i32, i32
  }
  func.func @transform_4(%arg0: i32, %arg1: i32) -> (i32, i32) {
    %c0_i32 = arith.constant 0 : i32
    %c0_i32_0 = arith.constant 0 : i32
    return %arg0, %c0_i32 : i32, i32
  }
}

</mosaic_0001>

<llo_original>
// kernel: tpu_custom_call.1
$region0: #{tpu_custom_call.1}
  #allocation0 [shape = 'u32[]', space=smem, size = 0x4, offset = 0x4, fixed_abs, tag = 'smem constant byte address 0x4 - core index']
  #allocation1 [shape = 'u32[72,128]{1,0:T(1,128)}', space=vmem, size = 0x9000, scoped, tag = 'internal scratch']
  #allocation2 [shape = 'f32[128,32]{1,0:T(8,128)}', space=vmem, size = 0x10000, scoped, tag = 'scratch operand']
  %s0 = inlined_call_operand.vmem [shape: f32[128,128], index: 0, kind: input, shape index: {}]
  %s1 = inlined_call_operand.vmem [shape: f32[128,32], index: 1, kind: input, shape index: {}]
  %s2 = inlined_call_operand.vmem [shape: f32[128,32], index: 2, kind: input, shape index: {}]
  %s3 = inlined_call_operand.vmem [shape: f32[128,32], index: 3, kind: output, shape index: {0}]
  %s4 = inlined_call_operand.vmem [shape: f32[128,32], index: 4, kind: output, shape index: {1}]
  %5 = xla_tuple %s3, %s4
  %s6 = sld [smem:[#allocation0]]
  $region38: #{tpu_custom_call.1} parent=0
    _
  %s8 = ssub.s32 1, %s6
  %s9 = scalar_select 0, %s8, %s6
  // Predicated region
  $region2: #{tpu_custom_call.1} parent=0 // pred_check
    _
  $region3: #{tpu_custom_call.1} parent=0 // pred_check_branch
    %11 = sbr.rel (0) target = $region5
  $region4: #{tpu_custom_call.1} parent=0 // pred_region
    _
  $region5: #{tpu_custom_call.1} parent=0 // pred_fallthru
    _
  // Predicated region
  $region6: #{tpu_custom_call.1} parent=0 // pred_check
    _
  $region7: #{tpu_custom_call.1} parent=0 // pred_check_branch
    %13 = sbr.rel (0) target = $region9
  $region8: #{tpu_custom_call.1} parent=0 // pred_region
    _
  $region9: #{tpu_custom_call.1} parent=0 // pred_fallthru
    _
  // Predicated region
  $region10: #{tpu_custom_call.1} parent=0 // pred_check
    _
  $region11: #{tpu_custom_call.1} parent=0 // pred_check_branch
    %15 = sbr.rel (0) target = $region13
  $region12: #{tpu_custom_call.1} parent=0 // pred_region
    _
  $region13: #{tpu_custom_call.1} parent=0 // pred_fallthru
    _
  %p16 = scmp.eq.s32.totalorder 0, 0
  // Predicated region
  $region14: #{tpu_custom_call.1} parent=0 // pred_check
    %p17 = pneg %p16
  $region15: #{tpu_custom_call.1} parent=0 // pred_check_branch
    %19 = sbr.rel (%p17) target = $region17
  $region16: #{tpu_custom_call.1} parent=0 // pred_region
    %vm20 = vcmask 261120
    %21 = vst.msk [vmem:[#allocation2] sm:$0xff] %vm20, 0.0
    %22 = vst.msk [vmem:[#allocation2 + $0x8] sm:$0xff] %vm20, 0.0
    %23 = vst.msk [vmem:[#allocation2 + $0x10] sm:$0xff] %vm20, 0.0
    %24 = vst.msk [vmem:[#allocation2 + $0x18] sm:$0xff] %vm20, 0.0
    %25 = vst.msk [vmem:[#allocation2 + $0x20] sm:$0xff] %vm20, 0.0
    %26 = vst.msk [vmem:[#allocation2 + $0x28] sm:$0xff] %vm20, 0.0
    %27 = vst.msk [vmem:[#allocation2 + $0x30] sm:$0xff] %vm20, 0.0
    %28 = vst.msk [vmem:[#allocation2 + $0x38] sm:$0xff] %vm20, 0.0
    %29 = vst.msk [vmem:[#allocation2 + $0x40] sm:$0xff] %vm20, 0.0
    %30 = vst.msk [vmem:[#allocation2 + $0x48] sm:$0xff] %vm20, 0.0
    %31 = vst.msk [vmem:[#allocation2 + $0x50] sm:$0xff] %vm20, 0.0
    %32 = vst.msk [vmem:[#allocation2 + $0x58] sm:$0xff] %vm20, 0.0
    %33 = vst.msk [vmem:[#allocation2 + $0x60] sm:$0xff] %vm20, 0.0
    %34 = vst.msk [vmem:[#allocation2 + $0x68] sm:$0xff] %vm20, 0.0
    %35 = vst.msk [vmem:[#allocation2 + $0x70] sm:$0xff] %vm20, 0.0
    %36 = vst.msk [vmem:[#allocation2 + $0x78] sm:$0xff] %vm20, 0.0
  $region17: #{tpu_custom_call.1} parent=0 // pred_fallthru
    _
  %v37 = vld [vmem:[#allocation2] sm:$0xff]
  %v38 = vld [vmem:[#allocation2 + $0x8] sm:$0xff]
  %v39 = vld [vmem:[#allocation2 + $0x10] sm:$0xff]
  %v40 = vld [vmem:[#allocation2 + $0x18] sm:$0xff]
  %v41 = vld [vmem:[#allocation2 + $0x20] sm:$0xff]
  %v42 = vld [vmem:[#allocation2 + $0x28] sm:$0xff]
  %v43 = vld [vmem:[#allocation2 + $0x30] sm:$0xff]
  %v44 = vld [vmem:[#allocation2 + $0x38] sm:$0xff]
  %v45 = vld [vmem:[#allocation2 + $0x40] sm:$0xff]
  %v46 = vld [vmem:[#allocation2 + $0x48] sm:$0xff]
  %v47 = vld [vmem:[#allocation2 + $0x50] sm:$0xff]
  %v48 = vld [vmem:[#allocation2 + $0x58] sm:$0xff]
  %v49 = vld [vmem:[#allocation2 + $0x60] sm:$0xff]
  %v50 = vld [vmem:[#allocation2 + $0x68] sm:$0xff]
  %v51 = vld [vmem:[#allocation2 + $0x70] sm:$0xff]
  %v52 = vld [vmem:[#allocation2 + $0x78] sm:$0xff]
  %v53 = vld [vmem:[%s0] sm:$0xff]
  %v54 = vld [vmem:[%s0 + $0x8] sm:$0xff]
  %v55 = vld [vmem:[%s0 + $0x10] sm:$0xff]
  %v56 = vld [vmem:[%s0 + $0x18] sm:$0xff]
  %v57 = vld [vmem:[%s0 + $0x20] sm:$0xff]
  %v58 = vld [vmem:[%s0 + $0x28] sm:$0xff]
  %v59 = vld [vmem:[%s0 + $0x30] sm:$0xff]
  %v60 = vld [vmem:[%s0 + $0x38] sm:$0xff]
  %v61 = vld [vmem:[%s0 + $0x40] sm:$0xff]
  %v62 = vld [vmem:[%s0 + $0x48] sm:$0xff]
  %v63 = vld [vmem:[%s0 + $0x50] sm:$0xff]
  %v64 = vld [vmem:[%s0 + $0x58] sm:$0xff]
  %v65 = vld [vmem:[%s0 + $0x60] sm:$0xff]
  %v66 = vld [vmem:[%s0 + $0x68] sm:$0xff]
  %v67 = vld [vmem:[%s0 + $0x70] sm:$0xff]
  %v68 = vld [vmem:[%s0 + $0x78] sm:$0xff]
  %v69 = vld [vmem:[%s1] sm:$0xff]
  %v70 = vld [vmem:[%s1 + $0x8] sm:$0xff]
  %v71 = vld [vmem:[%s1 + $0x10] sm:$0xff]
  %v72 = vld [vmem:[%s1 + $0x18] sm:$0xff]
  %v73 = vld [vmem:[%s1 + $0x20] sm:$0xff]
  %v74 = vld [vmem:[%s1 + $0x28] sm:$0xff]
  %v75 = vld [vmem:[%s1 + $0x30] sm:$0xff]
  %v76 = vld [vmem:[%s1 + $0x38] sm:$0xff]
  %v77 = vld [vmem:[%s1 + $0x40] sm:$0xff]
  %v78 = vld [vmem:[%s1 + $0x48] sm:$0xff]
  %v79 = vld [vmem:[%s1 + $0x50] sm:$0xff]
  %v80 = vld [vmem:[%s1 + $0x58] sm:$0xff]
  %v81 = vld [vmem:[%s1 + $0x60] sm:$0xff]
  %v82 = vld [vmem:[%s1 + $0x68] sm:$0xff]
  %v83 = vld [vmem:[%s1 + $0x70] sm:$0xff]
  %v84 = vld [vmem:[%s1 + $0x78] sm:$0xff]
  %85 = vmatpush.msra.mxu0 %v84
  %86 = vmatpush.msra.mxu0 %v83
  %87 = vmatpush.msra.mxu0 %v82
  %88 = vmatpush.msra.mxu0 %v81
  %89 = vmatpush.msra.mxu0 %v80
  %90 = vmatpush.msra.mxu0 %v79
  %91 = vmatpush.msra.mxu0 %v78
  %92 = vmatpush.msra.mxu0 %v77
  %93 = vmatpush.msra.mxu0 %v76
  %94 = vmatpush.msra.mxu0 %v75
  %95 = vmatpush.msra.mxu0 %v74
  %96 = vmatpush.msra.mxu0 %v73
  %97 = vmatpush.msra.mxu0 %v72
  %98 = vmatpush.msra.mxu0 %v71
  %99 = vmatpush.msra.mxu0 %v70
  %100 = vmatpush.msra.mxu0 %v69
  %101 = vmatmul.f32.gmra.mxu0 %v53
  %v102 = vpop.f32.mrf.mxu0
  %v103 = vadd.f32 0.0, %v102
  %104 = vmatmul.f32.gmra.mxu0 %v54
  %v105 = vpop.f32.mrf.mxu0
  %v106 = vadd.f32 0.0, %v105
  %107 = vmatmul.f32.gmra.mxu0 %v55
  %v108 = vpop.f32.mrf.mxu0
  %v109 = vadd.f32 0.0, %v108
  %110 = vmatmul.f32.gmra.mxu0 %v56
  %v111 = vpop.f32.mrf.mxu0
  %v112 = vadd.f32 0.0, %v111
  %113 = vmatmul.f32.gmra.mxu0 %v57
  %v114 = vpop.f32.mrf.mxu0
  %v115 = vadd.f32 0.0, %v114
  %116 = vmatmul.f32.gmra.mxu0 %v58
  %v117 = vpop.f32.mrf.mxu0
  %v118 = vadd.f32 0.0, %v117
  %119 = vmatmul.f32.gmra.mxu0 %v59
  %v120 = vpop.f32.mrf.mxu0
  %v121 = vadd.f32 0.0, %v120
  %122 = vmatmul.f32.gmra.mxu0 %v60
  %v123 = vpop.f32.mrf.mxu0
  %v124 = vadd.f32 0.0, %v123
  %125 = vmatmul.f32.gmra.mxu0 %v61
  %v126 = vpop.f32.mrf.mxu0
  %v127 = vadd.f32 0.0, %v126
  %128 = vmatmul.f32.gmra.mxu0 %v62
  %v129 = vpop.f32.mrf.mxu0
  %v130 = vadd.f32 0.0, %v129
  %131 = vmatmul.f32.gmra.mxu0 %v63
  %v132 = vpop.f32.mrf.mxu0
  %v133 = vadd.f32 0.0, %v132
  %134 = vmatmul.f32.gmra.mxu0 %v64
  %v135 = vpop.f32.mrf.mxu0
  %v136 = vadd.f32 0.0, %v135
  %137 = vmatmul.f32.gmra.mxu0 %v65
  %v138 = vpop.f32.mrf.mxu0
  %v139 = vadd.f32 0.0, %v138
  %140 = vmatmul.f32.gmra.mxu0 %v66
  %v141 = vpop.f32.mrf.mxu0
  %v142 = vadd.f32 0.0, %v141
  %143 = vmatmul.f32.gmra.mxu0 %v67
  %v144 = vpop.f32.mrf.mxu0
  %v145 = vadd.f32 0.0, %v144
  %146 = vmatmul.f32.gmra.mxu0 %v68
  %v147 = vpop.f32.mrf.mxu0
  %v148 = vadd.f32 0.0, %v147
  %149 = vdwg.mxu0
  %v150 = vadd.f32 %v37, %v103
  %v151 = vadd.f32 %v38, %v106
  %v152 = vadd.f32 %v39, %v109
  %v153 = vadd.f32 %v40, %v112
  %v154 = vadd.f32 %v41, %v115
  %v155 = vadd.f32 %v42, %v118
  %v156 = vadd.f32 %v43, %v121
  %v157 = vadd.f32 %v44, %v124
  %v158 = vadd.f32 %v45, %v127
  %v159 = vadd.f32 %v46, %v130
  %v160 = vadd.f32 %v47, %v133
  %v161 = vadd.f32 %v48, %v136
  %v162 = vadd.f32 %v49, %v139
  %v163 = vadd.f32 %v50, %v142
  %v164 = vadd.f32 %v51, %v145
  %v165 = vadd.f32 %v52, %v148
  %vm166 = vcmask 261120
  %167 = vst.msk [vmem:[#allocation2] sm:$0xff] %vm166, %v150
  %168 = vst.msk [vmem:[#allocation2 + $0x8] sm:$0xff] %vm166, %v151
  %169 = vst.msk [vmem:[#allocation2 + $0x10] sm:$0xff] %vm166, %v152
  %170 = vst.msk [vmem:[#allocation2 + $0x18] sm:$0xff] %vm166, %v153
  %171 = vst.msk [vmem:[#allocation2 + $0x20] sm:$0xff] %vm166, %v154
  %172 = vst.msk [vmem:[#allocation2 + $0x28] sm:$0xff] %vm166, %v155
  %173 = vst.msk [vmem:[#allocation2 + $0x30] sm:$0xff] %vm166, %v156
  %174 = vst.msk [vmem:[#allocation2 + $0x38] sm:$0xff] %vm166, %v157
  %175 = vst.msk [vmem:[#allocation2 + $0x40] sm:$0xff] %vm166, %v158
  %176 = vst.msk [vmem:[#allocation2 + $0x48] sm:$0xff] %vm166, %v159
  %177 = vst.msk [vmem:[#allocation2 + $0x50] sm:$0xff] %vm166, %v160
  %178 = vst.msk [vmem:[#allocation2 + $0x58] sm:$0xff] %vm166, %v161
  %179 = vst.msk [vmem:[#allocation2 + $0x60] sm:$0xff] %vm166, %v162
  %180 = vst.msk [vmem:[#allocation2 + $0x68] sm:$0xff] %vm166, %v163
  %181 = vst.msk [vmem:[#allocation2 + $0x70] sm:$0xff] %vm166, %v164
  %182 = vst.msk [vmem:[#allocation2 + $0x78] sm:$0xff] %vm166, %v165
  // Predicated region
  $region18: #{tpu_custom_call.1} parent=0 // pred_check
    %p183 = pneg %p16
  $region19: #{tpu_custom_call.1} parent=0 // pred_check_branch
    %185 = sbr.rel (%p183) target = $region21
  $region20: #{tpu_custom_call.1} parent=0 // pred_region
    %v186 = vld [vmem:[#allocation2] sm:$0xff]
    %v187 = vld [vmem:[#allocation2 + $0x8] sm:$0xff]
    %v188 = vld [vmem:[#allocation2 + $0x10] sm:$0xff]
    %v189 = vld [vmem:[#allocation2 + $0x18] sm:$0xff]
    %v190 = vld [vmem:[#allocation2 + $0x20] sm:$0xff]
    %v191 = vld [vmem:[#allocation2 + $0x28] sm:$0xff]
    %v192 = vld [vmem:[#allocation2 + $0x30] sm:$0xff]
    %v193 = vld [vmem:[#allocation2 + $0x38] sm:$0xff]
    %v194 = vld [vmem:[#allocation2 + $0x40] sm:$0xff]
    %v195 = vld [vmem:[#allocation2 + $0x48] sm:$0xff]
    %v196 = vld [vmem:[#allocation2 + $0x50] sm:$0xff]
    %v197 = vld [vmem:[#allocation2 + $0x58] sm:$0xff]
    %v198 = vld [vmem:[#allocation2 + $0x60] sm:$0xff]
    %v199 = vld [vmem:[#allocation2 + $0x68] sm:$0xff]
    %v200 = vld [vmem:[#allocation2 + $0x70] sm:$0xff]
    %v201 = vld [vmem:[#allocation2 + $0x78] sm:$0xff]
    %202 = vst.msk [vmem:[%s3] sm:$0xff] %vm166, %v186
    %203 = vst.msk [vmem:[%s3 + $0x8] sm:$0xff] %vm166, %v187
    %204 = vst.msk [vmem:[%s3 + $0x10] sm:$0xff] %vm166, %v188
    %205 = vst.msk [vmem:[%s3 + $0x18] sm:$0xff] %vm166, %v189
    %206 = vst.msk [vmem:[%s3 + $0x20] sm:$0xff] %vm166, %v190
    %207 = vst.msk [vmem:[%s3 + $0x28] sm:$0xff] %vm166, %v191
    %208 = vst.msk [vmem:[%s3 + $0x30] sm:$0xff] %vm166, %v192
    %209 = vst.msk [vmem:[%s3 + $0x38] sm:$0xff] %vm166, %v193
    %210 = vst.msk [vmem:[%s3 + $0x40] sm:$0xff] %vm166, %v194
    %211 = vst.msk [vmem:[%s3 + $0x48] sm:$0xff] %vm166, %v195
    %212 = vst.msk [vmem:[%s3 + $0x50] sm:$0xff] %vm166, %v196
    %213 = vst.msk [vmem:[%s3 + $0x58] sm:$0xff] %vm166, %v197
    %214 = vst.msk [vmem:[%s3 + $0x60] sm:$0xff] %vm166, %v198
    %215 = vst.msk [vmem:[%s3 + $0x68] sm:$0xff] %vm166, %v199
    %216 = vst.msk [vmem:[%s3 + $0x70] sm:$0xff] %vm166, %v200
    %217 = vst.msk [vmem:[%s3 + $0x78] sm:$0xff] %vm166, %v201
    %v218 = vld [vmem:[%s2] sm:$0xff]
    %v219 = vld [vmem:[%s2 + $0x8] sm:$0xff]
    %v220 = vld [vmem:[%s2 + $0x10] sm:$0xff]
    %v221 = vld [vmem:[%s2 + $0x18] sm:$0xff]
    %v222 = vld [vmem:[%s2 + $0x20] sm:$0xff]
    %v223 = vld [vmem:[%s2 + $0x28] sm:$0xff]
    %v224 = vld [vmem:[%s2 + $0x30] sm:$0xff]
    %v225 = vld [vmem:[%s2 + $0x38] sm:$0xff]
    %v226 = vld [vmem:[%s2 + $0x40] sm:$0xff]
    %v227 = vld [vmem:[%s2 + $0x48] sm:$0xff]
    %v228 = vld [vmem:[%s2 + $0x50] sm:$0xff]
    %v229 = vld [vmem:[%s2 + $0x58] sm:$0xff]
    %v230 = vld [vmem:[%s2 + $0x60] sm:$0xff]
    %v231 = vld [vmem:[%s2 + $0x68] sm:$0xff]
    %v232 = vld [vmem:[%s2 + $0x70] sm:$0xff]
    %v233 = vld [vmem:[%s2 + $0x78] sm:$0xff]
    %v234 = vadd.f32 %v218, %v186
    %v235 = vadd.f32 %v219, %v187
    %v236 = vadd.f32 %v220, %v188
    %v237 = vadd.f32 %v221, %v189
    %v238 = vadd.f32 %v222, %v190
    %v239 = vadd.f32 %v223, %v191
    %v240 = vadd.f32 %v224, %v192
    %v241 = vadd.f32 %v225, %v193
    %v242 = vadd.f32 %v226, %v194
    %v243 = vadd.f32 %v227, %v195
    %v244 = vadd.f32 %v228, %v196
    %v245 = vadd.f32 %v229, %v197
    %v246 = vadd.f32 %v230, %v198
    %v247 = vadd.f32 %v231, %v199
    %v248 = vadd.f32 %v232, %v200
    %v249 = vadd.f32 %v233, %v201
    %250 = vst.msk [vmem:[%s4] sm:$0xff] %vm166, %v234
    %251 = vst.msk [vmem:[%s4 + $0x8] sm:$0xff] %vm166, %v235
    %252 = vst.msk [vmem:[%s4 + $0x10] sm:$0xff] %vm166, %v236
    %253 = vst.msk [vmem:[%s4 + $0x18] sm:$0xff] %vm166, %v237
    %254 = vst.msk [vmem:[%s4 + $0x20] sm:$0xff] %vm166, %v238
    %255 = vst.msk [vmem:[%s4 + $0x28] sm:$0xff] %vm166, %v239
    %256 = vst.msk [vmem:[%s4 + $0x30] sm:$0xff] %vm166, %v240
    %257 = vst.msk [vmem:[%s4 + $0x38] sm:$0xff] %vm166, %v241
    %258 = vst.msk [vmem:[%s4 + $0x40] sm:$0xff] %vm166, %v242
    %259 = vst.msk [vmem:[%s4 + $0x48] sm:$0xff] %vm166, %v243
    %260 = vst.msk [vmem:[%s4 + $0x50] sm:$0xff] %vm166, %v244
    %261 = vst.msk [vmem:[%s4 + $0x58] sm:$0xff] %vm166, %v245
    %262 = vst.msk [vmem:[%s4 + $0x60] sm:$0xff] %vm166, %v246
    %263 = vst.msk [vmem:[%s4 + $0x68] sm:$0xff] %vm166, %v247
    %264 = vst.msk [vmem:[%s4 + $0x70] sm:$0xff] %vm166, %v248
    %265 = vst.msk [vmem:[%s4 + $0x78] sm:$0xff] %vm166, %v249
  $region21: #{tpu_custom_call.1} parent=0 // pred_fallthru
    _
  // Predicated region
  $region22: #{tpu_custom_call.1} parent=0 // pred_check
    _
  $region23: #{tpu_custom_call.1} parent=0 // pred_check_branch
    %267 = sbr.rel (0) target = $region25
  $region24: #{tpu_custom_call.1} parent=0 // pred_region
    _
  $region25: #{tpu_custom_call.1} parent=0 // pred_fallthru
    _
  // Predicated region
  $region26: #{tpu_custom_call.1} parent=0 // pred_check
    _
  $region27: #{tpu_custom_call.1} parent=0 // pred_check_branch
    %269 = sbr.rel (0) target = $region29
  $region28: #{tpu_custom_call.1} parent=0 // pred_region
    _
  $region29: #{tpu_custom_call.1} parent=0 // pred_fallthru
    _
  // Predicated region
  $region30: #{tpu_custom_call.1} parent=0 // pred_check
    _
  $region31: #{tpu_custom_call.1} parent=0 // pred_check_branch
    %271 = sbr.rel (0) target = $region33
  $region32: #{tpu_custom_call.1} parent=0 // pred_region
    _
  $region33: #{tpu_custom_call.1} parent=0 // pred_fallthru
    _
  // Predicated region
  $region34: #{tpu_custom_call.1} parent=0 // pred_check
    _
  $region35: #{tpu_custom_call.1} parent=0 // pred_check_branch
    %273 = sbr.rel (0) target = $region37
  $region36: #{tpu_custom_call.1} parent=0 // pred_region
    _
  $region37: #{tpu_custom_call.1} parent=0 // pred_fallthru
    _

</llo_original>
